<compile_context>
chip_gen: v7x
topology: tpu7x:2x2x1
jax: 0.10.0
libtpu: 0.0.40
codegen_flags: <defaults>
</compile_context>

<pallas_src>
import functools

import jax
import jax.numpy as jnp
from jax.experimental import pallas as pl
from jax.experimental.pallas import tpu as pltpu

_LANE = 128
_SUBLANE = 8


def _round_up(n, m):
    return ((n + m - 1) // m) * m


def _cvae_kernel(
    x_ref,        # (TB, D)        input batch tile
    c_ref,        # (1, Cp)        condition row (zero-padded)
    eps_ref,      # (TB, Lp)       N(0,1) noise (zero-padded)
    w1x_ref,      # (D,  Hp)       fc1 weight, x slice
    w1c_ref,      # (Cp, Hp)       fc1 weight, c slice
    b1_ref,       # (1,  Hp)
    w2122_ref,    # (Hp, 2*Lp)     [ :, :Lp ] = fc21, [ :, Lp: ] = fc22
    b2122_ref,    # (1,  2*Lp)
    w3z_ref,      # (Lp, Hp)       fc3 weight, z slice
    w3c_ref,      # (Cp, Hp)       fc3 weight, c slice
    b3_ref,       # (1,  Hp)
    w4_ref,       # (Hp, Dp)
    b4_ref,       # (1,  Dp)
    recon_ref,    # out (TB, Dp)
    mu_ref,       # out (TB, Lp)
    logvar_ref,   # out (TB, Lp)
):
    f32 = jnp.float32
    lp = mu_ref.shape[-1]

    x = x_ref[...]
    c = c_ref[...]

    # ---- encode: h1 = relu([x, c] @ W1 + b1) via split weights ----
    h1 = jnp.dot(x, w1x_ref[...], preferred_element_type=f32)
    h1 = h1 + jnp.dot(c, w1c_ref[...], preferred_element_type=f32)  # (1,Hp) bcast
    h1 = jnp.maximum(h1 + b1_ref[...], 0.0)

    # ---- fused latent heads: one matmul for [mu | logvar] ----
    head = jnp.dot(h1, w2122_ref[...], preferred_element_type=f32) + b2122_ref[...]
    mu = head[:, :lp]       # tile-aligned static slice
    logvar = head[:, lp:]   # tile-aligned static slice

    # ---- reparameterize ----
    z = mu + eps_ref[...] * jnp.exp(0.5 * logvar)

    # ---- decode: h3 = relu([z, c] @ W3 + b3) via split weights ----
    h3 = jnp.dot(z, w3z_ref[...], preferred_element_type=f32)
    h3 = h3 + jnp.dot(c, w3c_ref[...], preferred_element_type=f32)
    h3 = jnp.maximum(h3 + b3_ref[...], 0.0)

    logits = jnp.dot(h3, w4_ref[...], preferred_element_type=f32) + b4_ref[...]

    recon_ref[...] = jax.nn.sigmoid(logits).astype(recon_ref.dtype)
    mu_ref[...] = mu.astype(mu_ref.dtype)
    logvar_ref[...] = logvar.astype(logvar_ref.dtype)


def init_cvae_params(key, input_dim, hidden_dim, latent_dim, class_size):
    """Deterministic init mimicking nn.Linear (uniform +- 1/sqrt(fan_in)).

    Weights stored already transposed to (in_features, out_features)."""
    def linear(k, fan_in, fan_out):
        kw, kb = jax.random.split(k)
        bound = 1.0 / jnp.sqrt(fan_in)
        w = jax.random.uniform(kw, (fan_in, fan_out), jnp.float32, -bound, bound)
        b = jax.random.uniform(kb, (1, fan_out), jnp.float32, -bound, bound)
        return w, b

    k1, k21, k22, k3, k4 = jax.random.split(key, 5)
    params = {}
    params["w1"], params["b1"] = linear(k1, input_dim + class_size, hidden_dim)
    params["w21"], params["b21"] = linear(k21, hidden_dim, latent_dim)
    params["w22"], params["b22"] = linear(k22, hidden_dim, latent_dim)
    params["w3"], params["b3"] = linear(k3, latent_dim + class_size, hidden_dim)
    params["w4"], params["b4"] = linear(k4, hidden_dim, input_dim)
    return params


def prepare_cvae_params(params, input_dim, hidden_dim, latent_dim, class_size):
    """One-time weight prep: split the concat weights, fuse fc21|fc22 and
    zero-pad every matmul output dim to a multiple of 128 lanes."""
    D, H, L, C = input_dim, hidden_dim, latent_dim, class_size
    Dp = _round_up(D, _LANE)
    Hp = _round_up(H, _LANE)
    Lp = _round_up(L, _LANE)
    Cp = _round_up(C, _SUBLANE)

    def pad2(a, rows, cols):
        return jnp.pad(a, ((0, rows - a.shape[0]), (0, cols - a.shape[1])))

    prepped = {}
    # fc1 split into x-part / c-part
    prepped["w1x"] = pad2(params["w1"][:D, :], D, Hp)
    prepped["w1c"] = pad2(params["w1"][D:, :], Cp, Hp)
    prepped["b1"] = pad2(params["b1"], 1, Hp)

    # fc21 | fc22 fused into a single (Hp, 2*Lp) weight
    w2122 = jnp.zeros((Hp, 2 * Lp), jnp.float32)
    w2122 = w2122.at[:H, :L].set(params["w21"])
    w2122 = w2122.at[:H, Lp:Lp + L].set(params["w22"])
    b2122 = jnp.zeros((1, 2 * Lp), jnp.float32)
    b2122 = b2122.at[:, :L].set(params["b21"])
    b2122 = b2122.at[:, Lp:Lp + L].set(params["b22"])
    prepped["w2122"] = w2122
    prepped["b2122"] = b2122

    # fc3 split into z-part / c-part
    prepped["w3z"] = pad2(params["w3"][:L, :], Lp, Hp)
    prepped["w3c"] = pad2(params["w3"][L:, :], Cp, Hp)
    prepped["b3"] = pad2(params["b3"], 1, Hp)

    # fc4
    prepped["w4"] = pad2(params["w4"], Hp, Dp)
    prepped["b4"] = pad2(params["b4"], 1, Dp)
    return prepped


@functools.partial(jax.jit, static_argnames=("input_dim", "latent_dim", "class_size"))
def cvae_forward(prepped, x, c, eps, *, input_dim, latent_dim, class_size):
    """CVAE.forward(x, c) with the noise eps passed in explicitly.

    x:   (B, input_dim)   float32
    c:   (class_size,)    float32
    eps: (B, latent_dim)  float32  (plays the role of torch.randn_like(std))
    """
    D, L, C = input_dim, latent_dim, class_size
    B = x.shape[0]
    Hp = prepped["w1x"].shape[1]
    Lp = prepped["w3z"].shape[0]
    Dp = prepped["w4"].shape[1]
    Cp = prepped["w1c"].shape[0]

    # batch tiling (sublane-aligned; capped so tiles stay small vs scoped VMEM,
    # including on v7x's 64 MiB)
    TB = min(256, _round_up(B, _SUBLANE))
    Bp = _round_up(B, TB)
    grid = (Bp // TB,)

    xp = jnp.pad(x.astype(jnp.float32), ((0, Bp - B), (0, 0)))
    epsp = jnp.pad(eps.astype(jnp.float32), ((0, Bp - B), (0, Lp - L)))
    cp = jnp.pad(c.astype(jnp.float32).reshape(1, C), ((0, 0), (0, Cp - C)))

    row = lambda i: (i, 0)     # activation tiles stream with the grid
    const = lambda i: (0, 0)   # weights/biases stay VMEM-resident

    in_specs = [
        pl.BlockSpec((TB, D), row),                       # x
        pl.BlockSpec((1, Cp), const),                     # c
        pl.BlockSpec((TB, Lp), row),                      # eps
        pl.BlockSpec(prepped["w1x"].shape, const),
        pl.BlockSpec(prepped["w1c"].shape, const),
        pl.BlockSpec(prepped["b1"].shape, const),
        pl.BlockSpec(prepped["w2122"].shape, const),
        pl.BlockSpec(prepped["b2122"].shape, const),
        pl.BlockSpec(prepped["w3z"].shape, const),
        pl.BlockSpec(prepped["w3c"].shape, const),
        pl.BlockSpec(prepped["b3"].shape, const),
        pl.BlockSpec(prepped["w4"].shape, const),
        pl.BlockSpec(prepped["b4"].shape, const),
    ]
    out_specs = (
        pl.BlockSpec((TB, Dp), row),
        pl.BlockSpec((TB, Lp), row),
        pl.BlockSpec((TB, Lp), row),
    )
    out_shape = (
        jax.ShapeDtypeStruct((Bp, Dp), jnp.float32),
        jax.ShapeDtypeStruct((Bp, Lp), jnp.float32),
        jax.ShapeDtypeStruct((Bp, Lp), jnp.float32),
    )

    recon_p, mu_p, logvar_p = pl.pallas_call(
        _cvae_kernel,
        grid=grid,
        in_specs=in_specs,
        out_specs=out_specs,
        out_shape=out_shape,
        compiler_params=pltpu.CompilerParams(
            dimension_semantics=("parallel",),   # megacore-shardable batch axis
        ),
    )(
        xp, cp, epsp,
        prepped["w1x"], prepped["w1c"], prepped["b1"],
        prepped["w2122"], prepped["b2122"],
        prepped["w3z"], prepped["w3c"], prepped["b3"],
        prepped["w4"], prepped["b4"],
    )

    # strip batch / lane padding
    return recon_p[:B, :D], mu_p[:B, :L], logvar_p[:B, :L]


def cvae_forward_ref(params, x, c, eps):
    """Pure-JAX reference of the same forward pass (raw, unpadded params)."""
    B = x.shape[0]
    cb = jnp.broadcast_to(c[None, :], (B, c.shape[0]))
    xc = jnp.concatenate([x, cb], axis=1)
    h1 = jax.nn.relu(xc @ params["w1"] + params["b1"])
    mu = h1 @ params["w21"] + params["b21"]
    logvar = h1 @ params["w22"] + params["b22"]
    z = mu + eps * jnp.exp(0.5 * logvar)
    zc = jnp.concatenate([z, cb], axis=1)
    h3 = jax.nn.relu(zc @ params["w3"] + params["b3"])
    recon = jax.nn.sigmoid(h3 @ params["w4"] + params["b4"])
    return recon, mu, logvar


if __name__ == "__main__":
    # small shapes consistent with the module
    INPUT_DIM = 16
    HIDDEN_DIM = 32
    LATENT_DIM = 8
    CLASS_SIZE = 4
    BATCH = 8

    key = jax.random.PRNGKey(0)
    kp, kx, kc, ke = jax.random.split(key, 4)

    params = init_cvae_params(kp, INPUT_DIM, HIDDEN_DIM, LATENT_DIM, CLASS_SIZE)
    prepped = prepare_cvae_params(params, INPUT_DIM, HIDDEN_DIM, LATENT_DIM, CLASS_SIZE)

    x = jax.random.normal(kx, (BATCH, INPUT_DIM), jnp.float32)
    c = jax.random.normal(kc, (CLASS_SIZE,), jnp.float32)
    eps = jax.random.normal(ke, (BATCH, LATENT_DIM), jnp.float32)

    recon, mu, logvar = cvae_forward(
        prepped, x, c, eps,
        input_dim=INPUT_DIM, latent_dim=LATENT_DIM, class_size=CLASS_SIZE,
    )
    jax.block_until_ready((recon, mu, logvar))

    # sanity-check against pure-JAX reference
    r_ref, m_ref, lv_ref = cvae_forward_ref(params, x, c, eps)
    assert recon.shape == r_ref.shape and mu.shape == m_ref.shape
    assert jnp.allclose(recon, r_ref, atol=1e-5), "recon mismatch"
    assert jnp.allclose(mu, m_ref, atol=1e-5), "mu mismatch"
    assert jnp.allclose(logvar, lv_ref, atol=1e-5), "logvar mismatch"

    print("KERNEL_OK")
</pallas_src>

<mosaic_0001>
module attributes {stable_mosaic.version = 11 : i64} {
  func.func @_cvae_kernel(%arg0: i32, %arg1: memref<8x16xf32, #tpu.memory_space<vmem>>, %arg2: memref<1x8xf32, #tpu.memory_space<vmem>>, %arg3: memref<8x128xf32, #tpu.memory_space<vmem>>, %arg4: memref<16x128xf32, #tpu.memory_space<vmem>>, %arg5: memref<8x128xf32, #tpu.memory_space<vmem>>, %arg6: memref<1x128xf32, #tpu.memory_space<vmem>>, %arg7: memref<128x256xf32, #tpu.memory_space<vmem>>, %arg8: memref<1x256xf32, #tpu.memory_space<vmem>>, %arg9: memref<128x128xf32, #tpu.memory_space<vmem>>, %arg10: memref<8x128xf32, #tpu.memory_space<vmem>>, %arg11: memref<1x128xf32, #tpu.memory_space<vmem>>, %arg12: memref<128x128xf32, #tpu.memory_space<vmem>>, %arg13: memref<1x128xf32, #tpu.memory_space<vmem>>, %arg14: memref<8x128xf32, #tpu.memory_space<vmem>>, %arg15: memref<8x128xf32, #tpu.memory_space<vmem>>, %arg16: memref<8x128xf32, #tpu.memory_space<vmem>>) attributes {dimension_semantics = [#tpu.dimension_semantics<parallel>], iteration_bounds = array<i64: 1>, scalar_prefetch = 0 : i64, scratch_operands = 0 : i64, tpu.core_type = #tpu.core_type<tc>, window_params = [{transform_indices = @transform_0, window_bounds = array<i64: 8, 16>}, {pipeline_mode = #tpu.pipeline_mode<synchronous>, transform_indices = @transform_1, window_bounds = array<i64: 1, 8>}, {transform_indices = @transform_2, window_bounds = array<i64: 8, 128>}, {pipeline_mode = #tpu.pipeline_mode<synchronous>, transform_indices = @transform_3, window_bounds = array<i64: 16, 128>}, {pipeline_mode = #tpu.pipeline_mode<synchronous>, transform_indices = @transform_4, window_bounds = array<i64: 8, 128>}, {pipeline_mode = #tpu.pipeline_mode<synchronous>, transform_indices = @transform_5, window_bounds = array<i64: 1, 128>}, {pipeline_mode = #tpu.pipeline_mode<synchronous>, transform_indices = @transform_6, window_bounds = array<i64: 128, 256>}, {pipeline_mode = #tpu.pipeline_mode<synchronous>, transform_indices = @transform_7, window_bounds = array<i64: 1, 256>}, {pipeline_mode = #tpu.pipeline_mode<synchronous>, transform_indices = @transform_8, window_bounds = array<i64: 128, 128>}, {pipeline_mode = #tpu.pipeline_mode<synchronous>, transform_indices = @transform_9, window_bounds = array<i64: 8, 128>}, {pipeline_mode = #tpu.pipeline_mode<synchronous>, transform_indices = @transform_10, window_bounds = array<i64: 1, 128>}, {pipeline_mode = #tpu.pipeline_mode<synchronous>, transform_indices = @transform_11, window_bounds = array<i64: 128, 128>}, {pipeline_mode = #tpu.pipeline_mode<synchronous>, transform_indices = @transform_12, window_bounds = array<i64: 1, 128>}, {transform_indices = @transform_13, window_bounds = array<i64: 8, 128>}, {transform_indices = @transform_14, window_bounds = array<i64: 8, 128>}, {transform_indices = @transform_15, window_bounds = array<i64: 8, 128>}]} {
    %c0 = arith.constant 0 : index
    %c0_0 = arith.constant 0 : index
    %0 = vector.load %arg1[%c0, %c0_0] : memref<8x16xf32, #tpu.memory_space<vmem>>, vector<8x16xf32>
    %c0_1 = arith.constant 0 : index
    %c0_2 = arith.constant 0 : index
    %1 = vector.load %arg2[%c0_1, %c0_2] : memref<1x8xf32, #tpu.memory_space<vmem>>, vector<1x8xf32>
    %c0_3 = arith.constant 0 : index
    %c0_4 = arith.constant 0 : index
    %2 = vector.load %arg4[%c0_3, %c0_4] : memref<16x128xf32, #tpu.memory_space<vmem>>, vector<16x128xf32>
    %cst = arith.constant dense<0.000000e+00> : vector<8x128xf32>
    %3 = tpu.matmul %0, %2, %cst {dimension_numbers = #tpu.dot_dimension_numbers<[1], [0], [0], [1], [0, 0, 1, 1], [], []>} : vector<8x16xf32>, vector<16x128xf32>, vector<8x128xf32> -> vector<8x128xf32>
    %c0_5 = arith.constant 0 : index
    %c0_6 = arith.constant 0 : index
    %4 = vector.load %arg5[%c0_5, %c0_6] : memref<8x128xf32, #tpu.memory_space<vmem>>, vector<8x128xf32>
    %cst_7 = arith.constant dense<0.000000e+00> : vector<1x128xf32>
    %5 = tpu.matmul %1, %4, %cst_7 {dimension_numbers = #tpu.dot_dimension_numbers<[1], [0], [0], [1], [0, 0, 1, 1], [], []>} : vector<1x8xf32>, vector<8x128xf32>, vector<1x128xf32> -> vector<1x128xf32>
    %6 = vector.broadcast %5 : vector<1x128xf32> to vector<8x128xf32>
    %7 = arith.addf %3, %6 : vector<8x128xf32>
    %c0_8 = arith.constant 0 : index
    %c0_9 = arith.constant 0 : index
    %8 = vector.load %arg6[%c0_8, %c0_9] : memref<1x128xf32, #tpu.memory_space<vmem>>, vector<1x128xf32>
    %9 = vector.broadcast %8 : vector<1x128xf32> to vector<8x128xf32>
    %10 = arith.addf %7, %9 : vector<8x128xf32>
    %cst_10 = arith.constant 0.000000e+00 : f32
    %11 = vector.broadcast %cst_10 : f32 to vector<8x128xf32>
    %12 = arith.maximumf %10, %11 : vector<8x128xf32>
    %c0_11 = arith.constant 0 : index
    %c0_12 = arith.constant 0 : index
    %13 = vector.load %arg7[%c0_11, %c0_12] : memref<128x256xf32, #tpu.memory_space<vmem>>, vector<128x256xf32>
    %cst_13 = arith.constant dense<0.000000e+00> : vector<8x256xf32>
    %14 = tpu.matmul %12, %13, %cst_13 {dimension_numbers = #tpu.dot_dimension_numbers<[1], [0], [0], [1], [0, 0, 1, 1], [], []>} : vector<8x128xf32>, vector<128x256xf32>, vector<8x256xf32> -> vector<8x256xf32>
    %c0_14 = arith.constant 0 : index
    %c0_15 = arith.constant 0 : index
    %15 = vector.load %arg8[%c0_14, %c0_15] : memref<1x256xf32, #tpu.memory_space<vmem>>, vector<1x256xf32>
    %16 = vector.broadcast %15 : vector<1x256xf32> to vector<8x256xf32>
    %17 = arith.addf %14, %16 : vector<8x256xf32>
    %18 = vector.extract_strided_slice %17 {offsets = [0, 0], sizes = [8, 128], strides = [1, 1]} : vector<8x256xf32> to vector<8x128xf32>
    %19 = vector.extract_strided_slice %17 {offsets = [0, 128], sizes = [8, 128], strides = [1, 1]} : vector<8x256xf32> to vector<8x128xf32>
    %c0_16 = arith.constant 0 : index
    %c0_17 = arith.constant 0 : index
    %20 = vector.load %arg3[%c0_16, %c0_17] : memref<8x128xf32, #tpu.memory_space<vmem>>, vector<8x128xf32>
    %cst_18 = arith.constant 5.000000e-01 : f32
    %21 = vector.broadcast %cst_18 : f32 to vector<8x128xf32>
    %22 = arith.mulf %21, %19 : vector<8x128xf32>
    %23 = math.exp %22 : vector<8x128xf32>
    %24 = arith.mulf %20, %23 : vector<8x128xf32>
    %25 = arith.addf %18, %24 : vector<8x128xf32>
    %c0_19 = arith.constant 0 : index
    %c0_20 = arith.constant 0 : index
    %26 = vector.load %arg9[%c0_19, %c0_20] : memref<128x128xf32, #tpu.memory_space<vmem>>, vector<128x128xf32>
    %cst_21 = arith.constant dense<0.000000e+00> : vector<8x128xf32>
    %27 = tpu.matmul %25, %26, %cst_21 {dimension_numbers = #tpu.dot_dimension_numbers<[1], [0], [0], [1], [0, 0, 1, 1], [], []>} : vector<8x128xf32>, vector<128x128xf32>, vector<8x128xf32> -> vector<8x128xf32>
    %c0_22 = arith.constant 0 : index
    %c0_23 = arith.constant 0 : index
    %28 = vector.load %arg10[%c0_22, %c0_23] : memref<8x128xf32, #tpu.memory_space<vmem>>, vector<8x128xf32>
    %cst_24 = arith.constant dense<0.000000e+00> : vector<1x128xf32>
    %29 = tpu.matmul %1, %28, %cst_24 {dimension_numbers = #tpu.dot_dimension_numbers<[1], [0], [0], [1], [0, 0, 1, 1], [], []>} : vector<1x8xf32>, vector<8x128xf32>, vector<1x128xf32> -> vector<1x128xf32>
    %30 = vector.broadcast %29 : vector<1x128xf32> to vector<8x128xf32>
    %31 = arith.addf %27, %30 : vector<8x128xf32>
    %c0_25 = arith.constant 0 : index
    %c0_26 = arith.constant 0 : index
    %32 = vector.load %arg11[%c0_25, %c0_26] : memref<1x128xf32, #tpu.memory_space<vmem>>, vector<1x128xf32>
    %33 = vector.broadcast %32 : vector<1x128xf32> to vector<8x128xf32>
    %34 = arith.addf %31, %33 : vector<8x128xf32>
    %cst_27 = arith.constant 0.000000e+00 : f32
    %35 = vector.broadcast %cst_27 : f32 to vector<8x128xf32>
    %36 = arith.maximumf %34, %35 : vector<8x128xf32>
    %c0_28 = arith.constant 0 : index
    %c0_29 = arith.constant 0 : index
    %37 = vector.load %arg12[%c0_28, %c0_29] : memref<128x128xf32, #tpu.memory_space<vmem>>, vector<128x128xf32>
    %cst_30 = arith.constant dense<0.000000e+00> : vector<8x128xf32>
    %38 = tpu.matmul %36, %37, %cst_30 {dimension_numbers = #tpu.dot_dimension_numbers<[1], [0], [0], [1], [0, 0, 1, 1], [], []>} : vector<8x128xf32>, vector<128x128xf32>, vector<8x128xf32> -> vector<8x128xf32>
    %c0_31 = arith.constant 0 : index
    %c0_32 = arith.constant 0 : index
    %39 = vector.load %arg13[%c0_31, %c0_32] : memref<1x128xf32, #tpu.memory_space<vmem>>, vector<1x128xf32>
    %40 = vector.broadcast %39 : vector<1x128xf32> to vector<8x128xf32>
    %41 = arith.addf %38, %40 : vector<8x128xf32>
    %42 = arith.negf %41 : vector<8x128xf32>
    %43 = math.exp %42 : vector<8x128xf32>
    %cst_33 = arith.constant 1.000000e+00 : f32
    %44 = vector.broadcast %cst_33 : f32 to vector<8x128xf32>
    %45 = arith.addf %44, %43 : vector<8x128xf32>
    %46 = arith.divf %44, %45 : vector<8x128xf32>
    %c0_34 = arith.constant 0 : index
    %c0_35 = arith.constant 0 : index
    %47 = vector.load %arg14[%c0_34, %c0_35] : memref<8x128xf32, #tpu.memory_space<vmem>>, vector<8x128xf32>
    tpu.vector_store %arg14[%c0_34, %c0_35], %46 {strides = array<i32>} : memref<8x128xf32, #tpu.memory_space<vmem>>, vector<8x128xf32>,
    %c0_36 = arith.constant 0 : index
    %c0_37 = arith.constant 0 : index
    %48 = vector.load %arg15[%c0_36, %c0_37] : memref<8x128xf32, #tpu.memory_space<vmem>>, vector<8x128xf32>
    tpu.vector_store %arg15[%c0_36, %c0_37], %18 {strides = array<i32>} : memref<8x128xf32, #tpu.memory_space<vmem>>, vector<8x128xf32>,
    %c0_38 = arith.constant 0 : index
    %c0_39 = arith.constant 0 : index
    %49 = vector.load %arg16[%c0_38, %c0_39] : memref<8x128xf32, #tpu.memory_space<vmem>>, vector<8x128xf32>
    tpu.vector_store %arg16[%c0_38, %c0_39], %19 {strides = array<i32>} : memref<8x128xf32, #tpu.memory_space<vmem>>, vector<8x128xf32>,
    return
  }
  func.func @transform_0(%arg0: i32) -> (i32, i32) {
    %c0_i32 = arith.constant 0 : i32
    %c0_i32_0 = arith.constant 0 : i32
    return %arg0, %c0_i32 : i32, i32
  }
  func.func @transform_1(%arg0: i32) -> (i32, i32) {
    %c0_i32 = arith.constant 0 : i32
    %c0_i32_0 = arith.constant 0 : i32
    %c0_i32_1 = arith.constant 0 : i32
    return %c0_i32, %c0_i32_0 : i32, i32
  }
  func.func @transform_2(%arg0: i32) -> (i32, i32) {
    %c0_i32 = arith.constant 0 : i32
    %c0_i32_0 = arith.constant 0 : i32
    return %arg0, %c0_i32 : i32, i32
  }
  func.func @transform_3(%arg0: i32) -> (i32, i32) {
    %c0_i32 = arith.constant 0 : i32
    %c0_i32_0 = arith.constant 0 : i32
    %c0_i32_1 = arith.constant 0 : i32
    return %c0_i32, %c0_i32_0 : i32, i32
  }
  func.func @transform_4(%arg0: i32) -> (i32, i32) {
    %c0_i32 = arith.constant 0 : i32
    %c0_i32_0 = arith.constant 0 : i32
    %c0_i32_1 = arith.constant 0 : i32
    return %c0_i32, %c0_i32_0 : i32, i32
  }
  func.func @transform_5(%arg0: i32) -> (i32, i32) {
    %c0_i32 = arith.constant 0 : i32
    %c0_i32_0 = arith.constant 0 : i32
    %c0_i32_1 = arith.constant 0 : i32
    return %c0_i32, %c0_i32_0 : i32, i32
  }
  func.func @transform_6(%arg0: i32) -> (i32, i32) {
    %c0_i32 = arith.constant 0 : i32
    %c0_i32_0 = arith.constant 0 : i32
    %c0_i32_1 = arith.constant 0 : i32
    return %c0_i32, %c0_i32_0 : i32, i32
  }
  func.func @transform_7(%arg0: i32) -> (i32, i32) {
    %c0_i32 = arith.constant 0 : i32
    %c0_i32_0 = arith.constant 0 : i32
    %c0_i32_1 = arith.constant 0 : i32
    return %c0_i32, %c0_i32_0 : i32, i32
  }
  func.func @transform_8(%arg0: i32) -> (i32, i32) {
    %c0_i32 = arith.constant 0 : i32
    %c0_i32_0 = arith.constant 0 : i32
    %c0_i32_1 = arith.constant 0 : i32
    return %c0_i32, %c0_i32_0 : i32, i32
  }
  func.func @transform_9(%arg0: i32) -> (i32, i32) {
    %c0_i32 = arith.constant 0 : i32
    %c0_i32_0 = arith.constant 0 : i32
    %c0_i32_1 = arith.constant 0 : i32
    return %c0_i32, %c0_i32_0 : i32, i32
  }
  func.func @transform_10(%arg0: i32) -> (i32, i32) {
    %c0_i32 = arith.constant 0 : i32
    %c0_i32_0 = arith.constant 0 : i32
    %c0_i32_1 = arith.constant 0 : i32
    return %c0_i32, %c0_i32_0 : i32, i32
  }
  func.func @transform_11(%arg0: i32) -> (i32, i32) {
    %c0_i32 = arith.constant 0 : i32
    %c0_i32_0 = arith.constant 0 : i32
    %c0_i32_1 = arith.constant 0 : i32
    return %c0_i32, %c0_i32_0 : i32, i32
  }
  func.func @transform_12(%arg0: i32) -> (i32, i32) {
    %c0_i32 = arith.constant 0 : i32
    %c0_i32_0 = arith.constant 0 : i32
    %c0_i32_1 = arith.constant 0 : i32
    return %c0_i32, %c0_i32_0 : i32, i32
  }
  func.func @transform_13(%arg0: i32) -> (i32, i32) {
    %c0_i32 = arith.constant 0 : i32
    %c0_i32_0 = arith.constant 0 : i32
    return %arg0, %c0_i32 : i32, i32
  }
  func.func @transform_14(%arg0: i32) -> (i32, i32) {
    %c0_i32 = arith.constant 0 : i32
    %c0_i32_0 = arith.constant 0 : i32
    return %arg0, %c0_i32 : i32, i32
  }
  func.func @transform_15(%arg0: i32) -> (i32, i32) {
    %c0_i32 = arith.constant 0 : i32
    %c0_i32_0 = arith.constant 0 : i32
    return %arg0, %c0_i32 : i32, i32
  }
}

</mosaic_0001>

<llo_original>
// kernel: cvae_forward.1
$region0: #{cvae_forward.1}
  #allocation0 [shape = 'u32[]', space=smem, size = 0x4, offset = 0x4, fixed_abs, tag = 'smem constant byte address 0x4 - core index']
  #allocation1 [shape = 'u32[144,128]{1,0:T(1,128)}', space=vmem, size = 0x12000, scoped, tag = 'internal scratch']
  %s0 = inlined_call_operand.vmem [shape: f32[8,16], index: 0, kind: input, shape index: {}]
  %s1 = inlined_call_operand.vmem [shape: f32[1,8], index: 1, kind: input, shape index: {}]
  %s2 = inlined_call_operand.vmem [shape: f32[8,128], index: 2, kind: input, shape index: {}]
  %s3 = inlined_call_operand.vmem [shape: f32[16,128], index: 3, kind: input, shape index: {}]
  %s4 = inlined_call_operand.vmem [shape: f32[8,128], index: 4, kind: input, shape index: {}]
  %s5 = inlined_call_operand.hbm [shape: f32[1,128], index: 5, kind: input, shape index: {}]
  %s6 = inlined_call_operand.hbm [shape: f32[128,256], index: 6, kind: input, shape index: {}]
  %s7 = inlined_call_operand.hbm [shape: f32[1,256], index: 7, kind: input, shape index: {}]
  %s8 = inlined_call_operand.hbm [shape: f32[128,128], index: 8, kind: input, shape index: {}]
  %s9 = inlined_call_operand.vmem [shape: f32[8,128], index: 9, kind: input, shape index: {}]
  %s10 = inlined_call_operand.hbm [shape: f32[1,128], index: 10, kind: input, shape index: {}]
  %s11 = inlined_call_operand.hbm [shape: f32[128,128], index: 11, kind: input, shape index: {}]
  %s12 = inlined_call_operand.vmem [shape: f32[1,128], index: 12, kind: input, shape index: {}]
  %s13 = inlined_call_operand.hbm [shape: f32[8,128], index: 13, kind: output, shape index: {0}]
  %s14 = inlined_call_operand.hbm [shape: f32[8,128], index: 14, kind: output, shape index: {1}]
  %s15 = inlined_call_operand.hbm [shape: f32[8,128], index: 15, kind: output, shape index: {2}]
  %16 = xla_tuple %s13, %s14, %s15
  %s17 = sld [smem:[#allocation0]]
  $region102: #{cvae_forward.1} parent=0
    _
  %s19 = ssub.s32 1, %s17
  %s20 = scalar_select 0, %s19, %s17
  $region1: #{cvae_forward.1} parent=0
    #allocation2 [shape = 'u8[512]{0}', space=vmem, size = 0x400, scoped, tag = 'input window, operand 5, single buffered']
    #allocation3 [shape = 's32[1]{0}', space=sflag, size = 0x4, scoped, tag = 'scoped memory for cvae_forward.1']
    #allocation4 [shape = 's32[1]{0}', space=sflag, size = 0x4, scoped, tag = 'scoped memory for cvae_forward.1']
    #allocation5 [shape = 'u8[131072]{0}', space=vmem, size = 0x20000, scoped, tag = 'input window, operand 6, single buffered']
    #allocation6 [shape = 's32[1]{0}', space=sflag, size = 0x4, scoped, tag = 'scoped memory for cvae_forward.1']
    #allocation7 [shape = 'u8[1024]{0}', space=vmem, size = 0x400, scoped, tag = 'input window, operand 7, single buffered']
    #allocation8 [shape = 'u8[65536]{0}', space=vmem, size = 0x10000, scoped, tag = 'input window, operand 8, single buffered']
    #allocation9 [shape = 's32[1]{0}', space=sflag, size = 0x4, scoped, tag = 'scoped memory for cvae_forward.1']
    #allocation10 [shape = 'u8[512]{0}', space=vmem, size = 0x400, scoped, tag = 'input window, operand 10, single buffered']
    #allocation11 [shape = 'u8[65536]{0}', space=vmem, size = 0x10000, scoped, tag = 'input window, operand 11, single buffered']
    #allocation12 [shape = 's32[1]{0}', space=sflag, size = 0x4, scoped, tag = 'scoped memory for cvae_forward.1']
    #allocation13 [shape = 'u8[4096]{0}', space=vmem, size = 0x1000, scoped, tag = 'output window, operand 0, single buffered']
    #allocation14 [shape = 'u8[4096]{0}', space=vmem, size = 0x1000, scoped, tag = 'output window, operand 1, single buffered']
    #allocation15 [shape = 's32[1]{0}', space=sflag, size = 0x4, scoped, tag = 'scoped memory for cvae_forward.1']
    #allocation16 [shape = 'u8[4096]{0}', space=vmem, size = 0x1000, scoped, tag = 'output window, operand 2, single buffered']
    %21 = vsyncpa [#allocation3], 0
    %22 = vsyncpa [#allocation6], 0
    %23 = vsyncpa [#allocation9], 0
    %24 = vsyncpa [#allocation12], 0
    %25 = vsyncpa [#allocation4], 0
    %26 = vsyncpa [#allocation15], 0
    // Predicated region
    $region2: #{cvae_forward.1} parent=1 // pred_check
      _
    $region3: #{cvae_forward.1} parent=1 // pred_check_branch
      %28 = sbr.rel (0) target = $region5
    $region4: #{cvae_forward.1} parent=1 // pred_region
      _
    $region5: #{cvae_forward.1} parent=1 // pred_fallthru
      _
    // Predicated region
    $region6: #{cvae_forward.1} parent=1 // pred_check
      _
    $region7: #{cvae_forward.1} parent=1 // pred_check_branch
      %30 = sbr.rel (0) target = $region9
    $region8: #{cvae_forward.1} parent=1 // pred_region
      _
    $region9: #{cvae_forward.1} parent=1 // pred_fallthru
      _
    // Predicated region
    $region10: #{cvae_forward.1} parent=1 // pred_check
      _
    $region11: #{cvae_forward.1} parent=1 // pred_check_branch
      %32 = sbr.rel (0) target = $region13
    $region12: #{cvae_forward.1} parent=1 // pred_region
      _
    $region13: #{cvae_forward.1} parent=1 // pred_fallthru
      _
    // Predicated region
    $region14: #{cvae_forward.1} parent=1 // pred_check
      _
    $region15: #{cvae_forward.1} parent=1 // pred_check_branch
      %34 = sbr.rel (0) target = $region17
    $region16: #{cvae_forward.1} parent=1 // pred_region
      _
    $region17: #{cvae_forward.1} parent=1 // pred_fallthru
      _
    // Predicated region
    $region18: #{cvae_forward.1} parent=1 // pred_check
      _
    $region19: #{cvae_forward.1} parent=1 // pred_check_branch
      %36 = sbr.rel (0) target = $region21
    $region20: #{cvae_forward.1} parent=1 // pred_region
      _
    $region21: #{cvae_forward.1} parent=1 // pred_fallthru
      _
    // Predicated region
    $region22: #{cvae_forward.1} parent=1 // pred_check
      _
    $region23: #{cvae_forward.1} parent=1 // pred_check_branch
      %38 = sbr.rel (0) target = $region25
    $region24: #{cvae_forward.1} parent=1 // pred_region
      %s40 = ssub.s32 16, 16
      %41 = vsyncadd [#allocation3], %s40
      %s43 = sshll.u32 [#allocation2], 4
      %s44 = int_to_ptr.vmem [resolvable:$true] %s43
      %46 = dma.hbm_to_vmem [thread:$0]  %s5, 16, %s44, [#allocation3]
    $region25: #{cvae_forward.1} parent=1 // pred_fallthru
      _
    // Predicated region
    $region26: #{cvae_forward.1} parent=1 // pred_check
      _
    $region27: #{cvae_forward.1} parent=1 // pred_check_branch
      %48 = sbr.rel (0) target = $region29
    $region28: #{cvae_forward.1} parent=1 // pred_region
      %s50 = ssub.s32 4096, 4096
      %51 = vsyncadd [#allocation6], %s50
      %s52 = sshll.u32 [#allocation5], 4
      %s53 = int_to_ptr.vmem [resolvable:$true] %s52
      %58 = dma.hbm_to_vmem [thread:$0]  %s6, 4096, %s53, [#allocation6], 256, 256, 16
    $region29: #{cvae_forward.1} parent=1 // pred_fallthru
      _
    // Predicated region
    $region30: #{cvae_forward.1} parent=1 // pred_check
      _
    $region31: #{cvae_forward.1} parent=1 // pred_check_branch
      %60 = sbr.rel (0) target = $region33
    $region32: #{cvae_forward.1} parent=1 // pred_region
      %s62 = ssub.s32 32, 32
      %63 = vsyncadd [#allocation6], %s62
      %s65 = sshll.u32 [#allocation7], 4
      %s66 = int_to_ptr.vmem [resolvable:$true] %s65
      %68 = dma.hbm_to_vmem [thread:$0]  %s7, 32, %s66, [#allocation6]
    $region33: #{cvae_forward.1} parent=1 // pred_fallthru
      _
    // Predicated region
    $region34: #{cvae_forward.1} parent=1 // pred_check
      _
    $region35: #{cvae_forward.1} parent=1 // pred_check_branch
      %70 = sbr.rel (0) target = $region37
    $region36: #{cvae_forward.1} parent=1 // pred_region
      %s72 = ssub.s32 2048, 2048
      %73 = vsyncadd [#allocation9], %s72
      %s74 = sshll.u32 [#allocation8], 4
      %s75 = int_to_ptr.vmem [resolvable:$true] %s74
      %80 = dma.hbm_to_vmem [thread:$0]  %s8, 2048, %s75, [#allocation9], 128, 128, 8
    $region37: #{cvae_forward.1} parent=1 // pred_fallthru
      _
    // Predicated region
    $region38: #{cvae_forward.1} parent=1 // pred_check
      _
    $region39: #{cvae_forward.1} parent=1 // pred_check_branch
      %82 = sbr.rel (0) target = $region41
    $region40: #{cvae_forward.1} parent=1 // pred_region
      _
    $region41: #{cvae_forward.1} parent=1 // pred_fallthru
      _
    // Predicated region
    $region42: #{cvae_forward.1} parent=1 // pred_check
      _
    $region43: #{cvae_forward.1} parent=1 // pred_check_branch
      %84 = sbr.rel (0) target = $region45
    $region44: #{cvae_forward.1} parent=1 // pred_region
      %s86 = ssub.s32 16, 16
      %87 = vsyncadd [#allocation9], %s86
      %s89 = sshll.u32 [#allocation10], 4
      %s90 = int_to_ptr.vmem [resolvable:$true] %s89
      %92 = dma.hbm_to_vmem [thread:$0]  %s10, 16, %s90, [#allocation9]
    $region45: #{cvae_forward.1} parent=1 // pred_fallthru
      _
    // Predicated region
    $region46: #{cvae_forward.1} parent=1 // pred_check
      _
    $region47: #{cvae_forward.1} parent=1 // pred_check_branch
      %94 = sbr.rel (0) target = $region49
    $region48: #{cvae_forward.1} parent=1 // pred_region
      %s96 = ssub.s32 2048, 2048
      %97 = vsyncadd [#allocation12], %s96
      %s98 = sshll.u32 [#allocation11], 4
      %s99 = int_to_ptr.vmem [resolvable:$true] %s98
      %104 = dma.hbm_to_vmem [thread:$0]  %s11, 2048, %s99, [#allocation12], 128, 128, 8
    $region49: #{cvae_forward.1} parent=1 // pred_fallthru
      _
    // Predicated region
    $region50: #{cvae_forward.1} parent=1 // pred_check
      _
    $region51: #{cvae_forward.1} parent=1 // pred_check_branch
      %106 = sbr.rel (0) target = $region53
    $region52: #{cvae_forward.1} parent=1 // pred_region
      _
    $region53: #{cvae_forward.1} parent=1 // pred_fallthru
      _
    // Predicated region
    $region54: #{cvae_forward.1} parent=1 // pred_check
      _
    $region55: #{cvae_forward.1} parent=1 // pred_check_branch
      %108 = sbr.rel (0) target = $region57
    $region56: #{cvae_forward.1} parent=1 // pred_region
      %109 = dma.done [#allocation3], 16
    $region57: #{cvae_forward.1} parent=1 // pred_fallthru
      _
    // Predicated region
    $region58: #{cvae_forward.1} parent=1 // pred_check
      _
    $region59: #{cvae_forward.1} parent=1 // pred_check_branch
      %111 = sbr.rel (0) target = $region61
    $region60: #{cvae_forward.1} parent=1 // pred_region
      %112 = dma.done [#allocation6], 4096
    $region61: #{cvae_forward.1} parent=1 // pred_fallthru
      _
    // Predicated region
    $region62: #{cvae_forward.1} parent=1 // pred_check
      _
    $region63: #{cvae_forward.1} parent=1 // pred_check_branch
      %114 = sbr.rel (0) target = $region65
    $region64: #{cvae_forward.1} parent=1 // pred_region
      %115 = dma.done [#allocation6], 32
    $region65: #{cvae_forward.1} parent=1 // pred_fallthru
      _
    // Predicated region
    $region66: #{cvae_forward.1} parent=1 // pred_check
      _
    $region67: #{cvae_forward.1} parent=1 // pred_check_branch
      %117 = sbr.rel (0) target = $region69
    $region68: #{cvae_forward.1} parent=1 // pred_region
      %118 = dma.done [#allocation9], 2048
    $region69: #{cvae_forward.1} parent=1 // pred_fallthru
      _
    // Predicated region
    $region70: #{cvae_forward.1} parent=1 // pred_check
      _
    $region71: #{cvae_forward.1} parent=1 // pred_check_branch
      %120 = sbr.rel (0) target = $region73
    $region72: #{cvae_forward.1} parent=1 // pred_region
      %121 = dma.done [#allocation9], 16
    $region73: #{cvae_forward.1} parent=1 // pred_fallthru
      _
    // Predicated region
    $region74: #{cvae_forward.1} parent=1 // pred_check
      _
    $region75: #{cvae_forward.1} parent=1 // pred_check_branch
      %123 = sbr.rel (0) target = $region77
    $region76: #{cvae_forward.1} parent=1 // pred_region
      %124 = dma.done [#allocation12], 2048
    $region77: #{cvae_forward.1} parent=1 // pred_fallthru
      _
    %v125 = vld [vmem:[%s0] sm:$0xff]
    %v126 = vld [vmem:[%s1] sm:$0x1]
    %v127 = vld [vmem:[%s3] sm:$0xff]
    %v128 = vld [vmem:[%s3 + $0x8] sm:$0xff]
    %v129 = vld [vmem:[%s4] sm:$0xff]
    %vm130 = vcmask 64512
    %v132 = vsel %vm130, %v126, 0
    %134 = vmatprep.subr.mxu0 0.0
    %135 = vmatpush1.msra.mxu0 %v129
    %136 = vmatprep.subr.mxu0 0.0
    %137 = vmatpush1.msra.mxu0 0.0
    %138 = vmatprep.subr.mxu0 0.0
    %139 = vmatpush1.msra.mxu0 0.0
    %140 = vmatprep.subr.mxu0 0.0
    %141 = vmatpush1.msra.mxu0 0.0
    %142 = vmatprep.subr.mxu0 0.0
    %143 = vmatpush1.msra.mxu0 0.0
    %144 = vmatprep.subr.mxu0 0.0
    %145 = vmatpush1.msra.mxu0 0.0
    %146 = vmatprep.subr.mxu0 0.0
    %147 = vmatpush1.msra.mxu0 0.0
    %148 = vmatprep.subr.mxu0 0.0
    %149 = vmatpush1.msra.mxu0 0.0
    %150 = vmatprep.subr.mxu0 0.0
    %151 = vmatpush1.msra.mxu0 0.0
    %152 = vmatprep.subr.mxu0 0.0
    %153 = vmatpush1.msra.mxu0 0.0
    %154 = vmatprep.subr.mxu0 0.0
    %155 = vmatpush1.msra.mxu0 0.0
    %156 = vmatprep.subr.mxu0 0.0
    %157 = vmatpush1.msra.mxu0 0.0
    %158 = vmatprep.subr.mxu0 0.0
    %159 = vmatpush1.msra.mxu0 0.0
    %160 = vmatprep.subr.mxu0 0.0
    %161 = vmatpush1.msra.mxu0 0.0
    %162 = vmatprep.subr.mxu0 0.0
    %163 = vmatpush1.msra.mxu0 0.0
    %164 = vmatprep.subr.mxu0 0.0
    %165 = vmatpush1.msra.mxu0 0.0
    %166 = vmatprep.subr.mxu0 0.0
    %167 = vmatpush1.msra.mxu0 0.0
    %168 = vmatprep.subr.mxu0 0.0
    %169 = vmatpush1.msra.mxu0 0.0
    %170 = vmatprep.subr.mxu0 0.0
    %171 = vmatpush1.msra.mxu0 0.0
    %172 = vmatprep.subr.mxu0 0.0
    %173 = vmatpush1.msra.mxu0 0.0
    %174 = vmatprep.subr.mxu0 0.0
    %175 = vmatpush1.msra.mxu0 0.0
    %176 = vmatprep.subr.mxu0 0.0
    %177 = vmatpush1.msra.mxu0 0.0
    %178 = vmatprep.subr.mxu0 0.0
    %179 = vmatpush1.msra.mxu0 0.0
    %180 = vmatprep.subr.mxu0 0.0
    %181 = vmatpush1.msra.mxu0 0.0
    %182 = vmatprep.subr.mxu0 0.0
    %183 = vmatpush1.msra.mxu0 0.0
    %184 = vmatprep.subr.mxu0 0.0
    %185 = vmatpush1.msra.mxu0 0.0
    %186 = vmatprep.subr.mxu0 0.0
    %187 = vmatpush1.msra.mxu0 0.0
    %188 = vmatprep.subr.mxu0 0.0
    %189 = vmatpush1.msra.mxu0 0.0
    %190 = vmatprep.subr.mxu0 0.0
    %191 = vmatpush1.msra.mxu0 0.0
    %192 = vmatprep.subr.mxu0 0.0
    %193 = vmatpush1.msra.mxu0 0.0
    %194 = vmatprep.subr.mxu0 0.0
    %195 = vmatpush1.msra.mxu0 0.0
    %196 = vmatprep.subr.mxu0 0.0
    %197 = vmatpush1.msra.mxu0 0.0
    %198 = vmatprep.mubr.f32.mxu0 0.0
    %199 = vmatmul.mubr.f32.gmra.mrb[0].mxu0 %v132
    %v200 = vpop.f32.mrb[0].mxu0
    %v201 = vadd.f32 0.0, %v200
    %v202 = vpop.f32.mrb[0].mxu0
    %203 = vdwg.mxu0
    %v204 = vlaneseq
    %v205 = vshrl.u32 %v204, 7
    %v206 = vsub.s32 0, %v205
    %v207 = vrot.slane %v201, %v206
    %vm208 = vcmask 130048
    %v210 = vsel %vm208, %v125, 0
    %212 = vmatprep.subr.mxu0 0.0
    %213 = vmatpush1.msra.mxu0 %v127
    %214 = vmatprep.subr.mxu0 0.0
    %215 = vmatpush1.msra.mxu0 %v128
    %216 = vmatprep.subr.mxu0 0.0
    %217 = vmatpush1.msra.mxu0 0.0
    %218 = vmatprep.subr.mxu0 0.0
    %219 = vmatpush1.msra.mxu0 0.0
    %220 = vmatprep.subr.mxu0 0.0
    %221 = vmatpush1.msra.mxu0 0.0
    %222 = vmatprep.subr.mxu0 0.0
    %223 = vmatpush1.msra.mxu0 0.0
    %224 = vmatprep.subr.mxu0 0.0
    %225 = vmatpush1.msra.mxu0 0.0
    %226 = vmatprep.subr.mxu0 0.0
    %227 = vmatpush1.msra.mxu0 0.0
    %228 = vmatprep.subr.mxu0 0.0
    %229 = vmatpush1.msra.mxu0 0.0
    %230 = vmatprep.subr.mxu0 0.0
    %231 = vmatpush1.msra.mxu0 0.0
    %232 = vmatprep.subr.mxu0 0.0
    %233 = vmatpush1.msra.mxu0 0.0
    %234 = vmatprep.subr.mxu0 0.0
    %235 = vmatpush1.msra.mxu0 0.0
    %236 = vmatprep.subr.mxu0 0.0
    %237 = vmatpush1.msra.mxu0 0.0
    %238 = vmatprep.subr.mxu0 0.0
    %239 = vmatpush1.msra.mxu0 0.0
    %240 = vmatprep.subr.mxu0 0.0
    %241 = vmatpush1.msra.mxu0 0.0
    %242 = vmatprep.subr.mxu0 0.0
    %243 = vmatpush1.msra.mxu0 0.0
    %244 = vmatprep.subr.mxu0 0.0
    %245 = vmatpush1.msra.mxu0 0.0
    %246 = vmatprep.subr.mxu0 0.0
    %247 = vmatpush1.msra.mxu0 0.0
    %248 = vmatprep.subr.mxu0 0.0
    %249 = vmatpush1.msra.mxu0 0.0
    %250 = vmatprep.subr.mxu0 0.0
    %251 = vmatpush1.msra.mxu0 0.0
    %252 = vmatprep.subr.mxu0 0.0
    %253 = vmatpush1.msra.mxu0 0.0
    %254 = vmatprep.subr.mxu0 0.0
    %255 = vmatpush1.msra.mxu0 0.0
    %256 = vmatprep.subr.mxu0 0.0
    %257 = vmatpush1.msra.mxu0 0.0
    %258 = vmatprep.subr.mxu0 0.0
    %259 = vmatpush1.msra.mxu0 0.0
    %260 = vmatprep.subr.mxu0 0.0
    %261 = vmatpush1.msra.mxu0 0.0
    %262 = vmatprep.subr.mxu0 0.0
    %263 = vmatpush1.msra.mxu0 0.0
    %264 = vmatprep.subr.mxu0 0.0
    %265 = vmatpush1.msra.mxu0 0.0
    %266 = vmatprep.subr.mxu0 0.0
    %267 = vmatpush1.msra.mxu0 0.0
    %268 = vmatprep.subr.mxu0 0.0
    %269 = vmatpush1.msra.mxu0 0.0
    %270 = vmatprep.subr.mxu0 0.0
    %271 = vmatpush1.msra.mxu0 0.0
    %272 = vmatprep.subr.mxu0 0.0
    %273 = vmatpush1.msra.mxu0 0.0
    %274 = vmatprep.subr.mxu0 0.0
    %275 = vmatpush1.msra.mxu0 0.0
    %276 = vmatprep.mubr.f32.mxu0 0.0
    %277 = vmatmul.mubr.f32.gmra.mrb[0].mxu0 %v210
    %v278 = vpop.f32.mrb[0].mxu0
    %v279 = vadd.f32 %v207, %v278
    %v280 = vpop.f32.mrb[0].mxu0
    %281 = vdwg.mxu0
    %v282 = vld [vmem:[#allocation2] sm:$0x1]
    %v284 = vlaneseq
    %v285 = vshrl.u32 %v284, 7
    %v286 = vsub.s32 0, %v285
    %v287 = vrot.slane %v282, %v286
    %v289 = vadd.f32 %v279, %v287
    %v290 = vmax.f32 %v289, 0.0
    %v291 = vld [vmem:[#allocation5] sm:$0xff]
    %v292 = vld [vmem:[#allocation5 + $0x8] sm:$0xff]
    %v293 = vld [vmem:[#allocation5 + $0x10] sm:$0xff]
    %v294 = vld [vmem:[#allocation5 + $0x18] sm:$0xff]
    %v295 = vld [vmem:[#allocation5 + $0x20] sm:$0xff]
    %v296 = vld [vmem:[#allocation5 + $0x28] sm:$0xff]
    %v297 = vld [vmem:[#allocation5 + $0x30] sm:$0xff]
    %v298 = vld [vmem:[#allocation5 + $0x38] sm:$0xff]
    %v299 = vld [vmem:[#allocation5 + $0x40] sm:$0xff]
    %v300 = vld [vmem:[#allocation5 + $0x48] sm:$0xff]
    %v301 = vld [vmem:[#allocation5 + $0x50] sm:$0xff]
    %v302 = vld [vmem:[#allocation5 + $0x58] sm:$0xff]
    %v303 = vld [vmem:[#allocation5 + $0x60] sm:$0xff]
    %v304 = vld [vmem:[#allocation5 + $0x68] sm:$0xff]
    %v305 = vld [vmem:[#allocation5 + $0x70] sm:$0xff]
    %v306 = vld [vmem:[#allocation5 + $0x78] sm:$0xff]
    %v307 = vld [vmem:[#allocation5 + $0x80] sm:$0xff]
    %v308 = vld [vmem:[#allocation5 + $0x88] sm:$0xff]
    %v309 = vld [vmem:[#allocation5 + $0x90] sm:$0xff]
    %v310 = vld [vmem:[#allocation5 + $0x98] sm:$0xff]
    %v311 = vld [vmem:[#allocation5 + $0xa0] sm:$0xff]
    %v312 = vld [vmem:[#allocation5 + $0xa8] sm:$0xff]
    %v313 = vld [vmem:[#allocation5 + $0xb0] sm:$0xff]
    %v314 = vld [vmem:[#allocation5 + $0xb8] sm:$0xff]
    %v315 = vld [vmem:[#allocation5 + $0xc0] sm:$0xff]
    %v316 = vld [vmem:[#allocation5 + $0xc8] sm:$0xff]
    %v317 = vld [vmem:[#allocation5 + $0xd0] sm:$0xff]
    %v318 = vld [vmem:[#allocation5 + $0xd8] sm:$0xff]
    %v319 = vld [vmem:[#allocation5 + $0xe0] sm:$0xff]
    %v320 = vld [vmem:[#allocation5 + $0xe8] sm:$0xff]
    %v321 = vld [vmem:[#allocation5 + $0xf0] sm:$0xff]
    %v322 = vld [vmem:[#allocation5 + $0xf8] sm:$0xff]
    %v323 = vld [vmem:[#allocation7] sm:$0x3]
    %v325 = vlaneseq
    %v326 = vshrl.u32 %v325, 7
    %v327 = vsub.s32 0, %v326
    %v328 = vrot.slane %v323, %v327
    %v329 = vlaneseq
    %v330 = vshrl.u32 %v329, 7
    %v331 = vsub.s32 1, %v330
    %v332 = vrot.slane %v323, %v331
    %335 = vmatprep.subr.mxu0 %v292
    %336 = vmatpush1.msra.mxu0 %v291
    %337 = vmatprep.subr.mxu0 %v294
    %338 = vmatpush1.msra.mxu0 %v293
    %339 = vmatprep.subr.mxu0 %v296
    %340 = vmatpush1.msra.mxu0 %v295
    %341 = vmatprep.subr.mxu0 %v298
    %342 = vmatpush1.msra.mxu0 %v297
    %343 = vmatprep.subr.mxu0 %v300
    %344 = vmatpush1.msra.mxu0 %v299
    %345 = vmatprep.subr.mxu0 %v302
    %346 = vmatpush1.msra.mxu0 %v301
    %347 = vmatprep.subr.mxu0 %v304
    %348 = vmatpush1.msra.mxu0 %v303
    %349 = vmatprep.subr.mxu0 %v306
    %350 = vmatpush1.msra.mxu0 %v305
    %351 = vmatprep.subr.mxu0 %v308
    %352 = vmatpush1.msra.mxu0 %v307
    %353 = vmatprep.subr.mxu0 %v310
    %354 = vmatpush1.msra.mxu0 %v309
    %355 = vmatprep.subr.mxu0 %v312
    %356 = vmatpush1.msra.mxu0 %v311
    %357 = vmatprep.subr.mxu0 %v314
    %358 = vmatpush1.msra.mxu0 %v313
    %359 = vmatprep.subr.mxu0 %v316
    %360 = vmatpush1.msra.mxu0 %v315
    %361 = vmatprep.subr.mxu0 %v318
    %362 = vmatpush1.msra.mxu0 %v317
    %363 = vmatprep.subr.mxu0 %v320
    %364 = vmatpush1.msra.mxu0 %v319
    %365 = vmatprep.subr.mxu0 %v322
    %366 = vmatpush1.msra.mxu0 %v321
    %367 = vmatprep.subr.mxu0 0.0
    %368 = vmatpush1.msra.mxu0 0.0
    %369 = vmatprep.subr.mxu0 0.0
    %370 = vmatpush1.msra.mxu0 0.0
    %371 = vmatprep.subr.mxu0 0.0
    %372 = vmatpush1.msra.mxu0 0.0
    %373 = vmatprep.subr.mxu0 0.0
    %374 = vmatpush1.msra.mxu0 0.0
    %375 = vmatprep.subr.mxu0 0.0
    %376 = vmatpush1.msra.mxu0 0.0
    %377 = vmatprep.subr.mxu0 0.0
    %378 = vmatpush1.msra.mxu0 0.0
    %379 = vmatprep.subr.mxu0 0.0
    %380 = vmatpush1.msra.mxu0 0.0
    %381 = vmatprep.subr.mxu0 0.0
    %382 = vmatpush1.msra.mxu0 0.0
    %383 = vmatprep.subr.mxu0 0.0
    %384 = vmatpush1.msra.mxu0 0.0
    %385 = vmatprep.subr.mxu0 0.0
    %386 = vmatpush1.msra.mxu0 0.0
    %387 = vmatprep.subr.mxu0 0.0
    %388 = vmatpush1.msra.mxu0 0.0
    %389 = vmatprep.subr.mxu0 0.0
    %390 = vmatpush1.msra.mxu0 0.0
    %391 = vmatprep.subr.mxu0 0.0
    %392 = vmatpush1.msra.mxu0 0.0
    %393 = vmatprep.subr.mxu0 0.0
    %394 = vmatpush1.msra.mxu0 0.0
    %395 = vmatprep.subr.mxu0 0.0
    %396 = vmatpush1.msra.mxu0 0.0
    %397 = vmatprep.subr.mxu0 0.0
    %398 = vmatpush1.msra.mxu0 0.0
    %399 = vmatprep.mubr.f32.mxu0 0.0
    %400 = vmatmul.mubr.f32.gmra.mrb[0].mxu0 %v290
    %v401 = vpop.f32.mrb[0].mxu0
    %v402 = vadd.f32 %v328, %v401
    %v403 = vpop.f32.mrb[0].mxu0
    %v404 = vadd.f32 %v332, %v403
    %405 = vdwg.mxu0
    %v406 = vld [vmem:[%s2] sm:$0xff]
    %v407 = vmul.f32 %v404, 0.5
    %v408 = vmul.f32 %v407, 1.442695
    %v409 = vpow.pop %v408
    %v410 = vmul.f32 %v406, %v409
    %v411 = vadd.f32 %v402, %v410
    %v412 = vld [vmem:[#allocation8] sm:$0xff]
    %v413 = vld [vmem:[#allocation8 + $0x8] sm:$0xff]
    %v414 = vld [vmem:[#allocation8 + $0x10] sm:$0xff]
    %v415 = vld [vmem:[#allocation8 + $0x18] sm:$0xff]
    %v416 = vld [vmem:[#allocation8 + $0x20] sm:$0xff]
    %v417 = vld [vmem:[#allocation8 + $0x28] sm:$0xff]
    %v418 = vld [vmem:[#allocation8 + $0x30] sm:$0xff]
    %v419 = vld [vmem:[#allocation8 + $0x38] sm:$0xff]
    %v420 = vld [vmem:[#allocation8 + $0x40] sm:$0xff]
    %v421 = vld [vmem:[#allocation8 + $0x48] sm:$0xff]
    %v422 = vld [vmem:[#allocation8 + $0x50] sm:$0xff]
    %v423 = vld [vmem:[#allocation8 + $0x58] sm:$0xff]
    %v424 = vld [vmem:[#allocation8 + $0x60] sm:$0xff]
    %v425 = vld [vmem:[#allocation8 + $0x68] sm:$0xff]
    %v426 = vld [vmem:[#allocation8 + $0x70] sm:$0xff]
    %v427 = vld [vmem:[#allocation8 + $0x78] sm:$0xff]
    %v428 = vld [vmem:[%s9] sm:$0xff]
    %429 = vmatprep.subr.mxu0 0.0
    %430 = vmatpush1.msra.mxu0 %v428
    %431 = vmatprep.subr.mxu0 0.0
    %432 = vmatpush1.msra.mxu0 0.0
    %433 = vmatprep.subr.mxu0 0.0
    %434 = vmatpush1.msra.mxu0 0.0
    %435 = vmatprep.subr.mxu0 0.0
    %436 = vmatpush1.msra.mxu0 0.0
    %437 = vmatprep.subr.mxu0 0.0
    %438 = vmatpush1.msra.mxu0 0.0
    %439 = vmatprep.subr.mxu0 0.0
    %440 = vmatpush1.msra.mxu0 0.0
    %441 = vmatprep.subr.mxu0 0.0
    %442 = vmatpush1.msra.mxu0 0.0
    %443 = vmatprep.subr.mxu0 0.0
    %444 = vmatpush1.msra.mxu0 0.0
    %445 = vmatprep.subr.mxu0 0.0
    %446 = vmatpush1.msra.mxu0 0.0
    %447 = vmatprep.subr.mxu0 0.0
    %448 = vmatpush1.msra.mxu0 0.0
    %449 = vmatprep.subr.mxu0 0.0
    %450 = vmatpush1.msra.mxu0 0.0
    %451 = vmatprep.subr.mxu0 0.0
    %452 = vmatpush1.msra.mxu0 0.0
    %453 = vmatprep.subr.mxu0 0.0
    %454 = vmatpush1.msra.mxu0 0.0
    %455 = vmatprep.subr.mxu0 0.0
    %456 = vmatpush1.msra.mxu0 0.0
    %457 = vmatprep.subr.mxu0 0.0
    %458 = vmatpush1.msra.mxu0 0.0
    %459 = vmatprep.subr.mxu0 0.0
    %460 = vmatpush1.msra.mxu0 0.0
    %461 = vmatprep.subr.mxu0 0.0
    %462 = vmatpush1.msra.mxu0 0.0
    %463 = vmatprep.subr.mxu0 0.0
    %464 = vmatpush1.msra.mxu0 0.0
    %465 = vmatprep.subr.mxu0 0.0
    %466 = vmatpush1.msra.mxu0 0.0
    %467 = vmatprep.subr.mxu0 0.0
    %468 = vmatpush1.msra.mxu0 0.0
    %469 = vmatprep.subr.mxu0 0.0
    %470 = vmatpush1.msra.mxu0 0.0
    %471 = vmatprep.subr.mxu0 0.0
    %472 = vmatpush1.msra.mxu0 0.0
    %473 = vmatprep.subr.mxu0 0.0
    %474 = vmatpush1.msra.mxu0 0.0
    %475 = vmatprep.subr.mxu0 0.0
    %476 = vmatpush1.msra.mxu0 0.0
    %477 = vmatprep.subr.mxu0 0.0
    %478 = vmatpush1.msra.mxu0 0.0
    %479 = vmatprep.subr.mxu0 0.0
    %480 = vmatpush1.msra.mxu0 0.0
    %481 = vmatprep.subr.mxu0 0.0
    %482 = vmatpush1.msra.mxu0 0.0
    %483 = vmatprep.subr.mxu0 0.0
    %484 = vmatpush1.msra.mxu0 0.0
    %485 = vmatprep.subr.mxu0 0.0
    %486 = vmatpush1.msra.mxu0 0.0
    %487 = vmatprep.subr.mxu0 0.0
    %488 = vmatpush1.msra.mxu0 0.0
    %489 = vmatprep.subr.mxu0 0.0
    %490 = vmatpush1.msra.mxu0 0.0
    %491 = vmatprep.subr.mxu0 0.0
    %492 = vmatpush1.msra.mxu0 0.0
    %493 = vmatprep.mubr.f32.mxu0 0.0
    %494 = vmatmul.mubr.f32.gmra.mrb[0].mxu0 %v132
    %v495 = vpop.f32.mrb[0].mxu0
    %v496 = vadd.f32 0.0, %v495
    %v497 = vpop.f32.mrb[0].mxu0
    %498 = vdwg.mxu0
    %v499 = vlaneseq
    %v500 = vshrl.u32 %v499, 7
    %v501 = vsub.s32 0, %v500
    %v502 = vrot.slane %v496, %v501
    %503 = vmatprep.subr.mxu0 0.0
    %504 = vmatpush1.msra.mxu0 %v412
    %505 = vmatprep.subr.mxu0 0.0
    %506 = vmatpush1.msra.mxu0 %v413
    %507 = vmatprep.subr.mxu0 0.0
    %508 = vmatpush1.msra.mxu0 %v414
    %509 = vmatprep.subr.mxu0 0.0
    %510 = vmatpush1.msra.mxu0 %v415
    %511 = vmatprep.subr.mxu0 0.0
    %512 = vmatpush1.msra.mxu0 %v416
    %513 = vmatprep.subr.mxu0 0.0
    %514 = vmatpush1.msra.mxu0 %v417
    %515 = vmatprep.subr.mxu0 0.0
    %516 = vmatpush1.msra.mxu0 %v418
    %517 = vmatprep.subr.mxu0 0.0
    %518 = vmatpush1.msra.mxu0 %v419
    %519 = vmatprep.subr.mxu0 0.0
    %520 = vmatpush1.msra.mxu0 %v420
    %521 = vmatprep.subr.mxu0 0.0
    %522 = vmatpush1.msra.mxu0 %v421
    %523 = vmatprep.subr.mxu0 0.0
    %524 = vmatpush1.msra.mxu0 %v422
    %525 = vmatprep.subr.mxu0 0.0
    %526 = vmatpush1.msra.mxu0 %v423
    %527 = vmatprep.subr.mxu0 0.0
    %528 = vmatpush1.msra.mxu0 %v424
    %529 = vmatprep.subr.mxu0 0.0
    %530 = vmatpush1.msra.mxu0 %v425
    %531 = vmatprep.subr.mxu0 0.0
    %532 = vmatpush1.msra.mxu0 %v426
    %533 = vmatprep.subr.mxu0 0.0
    %534 = vmatpush1.msra.mxu0 %v427
    %535 = vmatprep.subr.mxu0 0.0
    %536 = vmatpush1.msra.mxu0 0.0
    %537 = vmatprep.subr.mxu0 0.0
    %538 = vmatpush1.msra.mxu0 0.0
    %539 = vmatprep.subr.mxu0 0.0
    %540 = vmatpush1.msra.mxu0 0.0
    %541 = vmatprep.subr.mxu0 0.0
    %542 = vmatpush1.msra.mxu0 0.0
    %543 = vmatprep.subr.mxu0 0.0
    %544 = vmatpush1.msra.mxu0 0.0
    %545 = vmatprep.subr.mxu0 0.0
    %546 = vmatpush1.msra.mxu0 0.0
    %547 = vmatprep.subr.mxu0 0.0
    %548 = vmatpush1.msra.mxu0 0.0
    %549 = vmatprep.subr.mxu0 0.0
    %550 = vmatpush1.msra.mxu0 0.0
    %551 = vmatprep.subr.mxu0 0.0
    %552 = vmatpush1.msra.mxu0 0.0
    %553 = vmatprep.subr.mxu0 0.0
    %554 = vmatpush1.msra.mxu0 0.0
    %555 = vmatprep.subr.mxu0 0.0
    %556 = vmatpush1.msra.mxu0 0.0
    %557 = vmatprep.subr.mxu0 0.0
    %558 = vmatpush1.msra.mxu0 0.0
    %559 = vmatprep.subr.mxu0 0.0
    %560 = vmatpush1.msra.mxu0 0.0
    %561 = vmatprep.subr.mxu0 0.0
    %562 = vmatpush1.msra.mxu0 0.0
    %563 = vmatprep.subr.mxu0 0.0
    %564 = vmatpush1.msra.mxu0 0.0
    %565 = vmatprep.subr.mxu0 0.0
    %566 = vmatpush1.msra.mxu0 0.0
    %567 = vmatprep.mubr.f32.mxu0 0.0
    %568 = vmatmul.mubr.f32.gmra.mrb[0].mxu0 %v411
    %v569 = vpop.f32.mrb[0].mxu0
    %v570 = vadd.f32 %v502, %v569
    %v571 = vpop.f32.mrb[0].mxu0
    %572 = vdwg.mxu0
    %v573 = vld [vmem:[#allocation10] sm:$0x1]
    %v575 = vlaneseq
    %v576 = vshrl.u32 %v575, 7
    %v577 = vsub.s32 0, %v576
    %v578 = vrot.slane %v573, %v577
    %v580 = vadd.f32 %v570, %v578
    %v581 = vmax.f32 %v580, 0.0
    %v582 = vld [vmem:[#allocation11] sm:$0xff]
    %v583 = vld [vmem:[#allocation11 + $0x8] sm:$0xff]
    %v584 = vld [vmem:[#allocation11 + $0x10] sm:$0xff]
    %v585 = vld [vmem:[#allocation11 + $0x18] sm:$0xff]
    %v586 = vld [vmem:[#allocation11 + $0x20] sm:$0xff]
    %v587 = vld [vmem:[#allocation11 + $0x28] sm:$0xff]
    %v588 = vld [vmem:[#allocation11 + $0x30] sm:$0xff]
    %v589 = vld [vmem:[#allocation11 + $0x38] sm:$0xff]
    %v590 = vld [vmem:[#allocation11 + $0x40] sm:$0xff]
    %v591 = vld [vmem:[#allocation11 + $0x48] sm:$0xff]
    %v592 = vld [vmem:[#allocation11 + $0x50] sm:$0xff]
    %v593 = vld [vmem:[#allocation11 + $0x58] sm:$0xff]
    %v594 = vld [vmem:[#allocation11 + $0x60] sm:$0xff]
    %v595 = vld [vmem:[#allocation11 + $0x68] sm:$0xff]
    %v596 = vld [vmem:[#allocation11 + $0x70] sm:$0xff]
    %v597 = vld [vmem:[#allocation11 + $0x78] sm:$0xff]
    %v598 = vld [vmem:[%s12] sm:$0x1]
    %v600 = vlaneseq
    %v601 = vshrl.u32 %v600, 7
    %v602 = vsub.s32 0, %v601
    %v603 = vrot.slane %v598, %v602
    %605 = vmatprep.subr.mxu0 0.0
    %606 = vmatpush1.msra.mxu0 %v582
    %607 = vmatprep.subr.mxu0 0.0
    %608 = vmatpush1.msra.mxu0 %v583
    %609 = vmatprep.subr.mxu0 0.0
    %610 = vmatpush1.msra.mxu0 %v584
    %611 = vmatprep.subr.mxu0 0.0
    %612 = vmatpush1.msra.mxu0 %v585
    %613 = vmatprep.subr.mxu0 0.0
    %614 = vmatpush1.msra.mxu0 %v586
    %615 = vmatprep.subr.mxu0 0.0
    %616 = vmatpush1.msra.mxu0 %v587
    %617 = vmatprep.subr.mxu0 0.0
    %618 = vmatpush1.msra.mxu0 %v588
    %619 = vmatprep.subr.mxu0 0.0
    %620 = vmatpush1.msra.mxu0 %v589
    %621 = vmatprep.subr.mxu0 0.0
    %622 = vmatpush1.msra.mxu0 %v590
    %623 = vmatprep.subr.mxu0 0.0
    %624 = vmatpush1.msra.mxu0 %v591
    %625 = vmatprep.subr.mxu0 0.0
    %626 = vmatpush1.msra.mxu0 %v592
    %627 = vmatprep.subr.mxu0 0.0
    %628 = vmatpush1.msra.mxu0 %v593
    %629 = vmatprep.subr.mxu0 0.0
    %630 = vmatpush1.msra.mxu0 %v594
    %631 = vmatprep.subr.mxu0 0.0
    %632 = vmatpush1.msra.mxu0 %v595
    %633 = vmatprep.subr.mxu0 0.0
    %634 = vmatpush1.msra.mxu0 %v596
    %635 = vmatprep.subr.mxu0 0.0
    %636 = vmatpush1.msra.mxu0 %v597
    %637 = vmatprep.subr.mxu0 0.0
    %638 = vmatpush1.msra.mxu0 0.0
    %639 = vmatprep.subr.mxu0 0.0
    %640 = vmatpush1.msra.mxu0 0.0
    %641 = vmatprep.subr.mxu0 0.0
    %642 = vmatpush1.msra.mxu0 0.0
    %643 = vmatprep.subr.mxu0 0.0
    %644 = vmatpush1.msra.mxu0 0.0
    %645 = vmatprep.subr.mxu0 0.0
    %646 = vmatpush1.msra.mxu0 0.0
    %647 = vmatprep.subr.mxu0 0.0
    %648 = vmatpush1.msra.mxu0 0.0
    %649 = vmatprep.subr.mxu0 0.0
    %650 = vmatpush1.msra.mxu0 0.0
    %651 = vmatprep.subr.mxu0 0.0
    %652 = vmatpush1.msra.mxu0 0.0
    %653 = vmatprep.subr.mxu0 0.0
    %654 = vmatpush1.msra.mxu0 0.0
    %655 = vmatprep.subr.mxu0 0.0
    %656 = vmatpush1.msra.mxu0 0.0
    %657 = vmatprep.subr.mxu0 0.0
    %658 = vmatpush1.msra.mxu0 0.0
    %659 = vmatprep.subr.mxu0 0.0
    %660 = vmatpush1.msra.mxu0 0.0
    %661 = vmatprep.subr.mxu0 0.0
    %662 = vmatpush1.msra.mxu0 0.0
    %663 = vmatprep.subr.mxu0 0.0
    %664 = vmatpush1.msra.mxu0 0.0
    %665 = vmatprep.subr.mxu0 0.0
    %666 = vmatpush1.msra.mxu0 0.0
    %667 = vmatprep.subr.mxu0 0.0
    %668 = vmatpush1.msra.mxu0 0.0
    %669 = vmatprep.mubr.f32.mxu0 0.0
    %670 = vmatmul.mubr.f32.gmra.mrb[0].mxu0 %v581
    %v671 = vpop.f32.mrb[0].mxu0
    %v672 = vadd.f32 %v603, %v671
    %v673 = vpop.f32.mrb[0].mxu0
    %674 = vdwg.mxu0
    %v675 = vxor.u32 %v672, 2147483648
    %v676 = vmul.f32 %v675, 1.442695
    %v677 = vpow.pop %v676
    %v678 = vadd.f32 %v677, 1.0
    %v679 = vrcp.pop %v678
    %v680 = vmul.f32 1.0, %v679
    %681 = vst [vmem:[#allocation13] sm:$0xff] %v680
    %682 = vst [vmem:[#allocation14] sm:$0xff] %v402
    %683 = vst [vmem:[#allocation16] sm:$0xff] %v404
    // Predicated region
    $region78: #{cvae_forward.1} parent=1 // pred_check
      _
    $region79: #{cvae_forward.1} parent=1 // pred_check_branch
      %685 = sbr.rel (0) target = $region81
    $region80: #{cvae_forward.1} parent=1 // pred_region
      %s687 = ssub.s32 128, 128
      %688 = vsyncadd [#allocation4], %s687
      %s690 = sshll.u32 [#allocation13], 4
      %s691 = int_to_ptr.vmem [resolvable:$true] %s690
      %693 = dma.vmem_to_hbm [thread:$0]  %s691, 128, %s13, [#allocation4]
    $region81: #{cvae_forward.1} parent=1 // pred_fallthru
      _
    // Predicated region
    $region82: #{cvae_forward.1} parent=1 // pred_check
      _
    $region83: #{cvae_forward.1} parent=1 // pred_check_branch
      %695 = sbr.rel (0) target = $region85
    $region84: #{cvae_forward.1} parent=1 // pred_region
      %s697 = ssub.s32 128, 128
      %698 = vsyncadd [#allocation15], %s697
      %s700 = sshll.u32 [#allocation14], 4
      %s701 = int_to_ptr.vmem [resolvable:$true] %s700
      %703 = dma.vmem_to_hbm [thread:$0]  %s701, 128, %s14, [#allocation15]
    $region85: #{cvae_forward.1} parent=1 // pred_fallthru
      _
    // Predicated region
    $region86: #{cvae_forward.1} parent=1 // pred_check
      _
    $region87: #{cvae_forward.1} parent=1 // pred_check_branch
      %705 = sbr.rel (0) target = $region89
    $region88: #{cvae_forward.1} parent=1 // pred_region
      %s707 = ssub.s32 128, 128
      %708 = vsyncadd [#allocation15], %s707
      %s710 = sshll.u32 [#allocation16], 4
      %s711 = int_to_ptr.vmem [resolvable:$true] %s710
      %713 = dma.vmem_to_hbm [thread:$0]  %s711, 128, %s15, [#allocation15]
    $region89: #{cvae_forward.1} parent=1 // pred_fallthru
      _
    // Predicated region
    $region90: #{cvae_forward.1} parent=1 // pred_check
      _
    $region91: #{cvae_forward.1} parent=1 // pred_check_branch
      %715 = sbr.rel (0) target = $region93
    $region92: #{cvae_forward.1} parent=1 // pred_region
      %716 = dma.done [#allocation4], 128
    $region93: #{cvae_forward.1} parent=1 // pred_fallthru
      _
    // Predicated region
    $region94: #{cvae_forward.1} parent=1 // pred_check
      _
    $region95: #{cvae_forward.1} parent=1 // pred_check_branch
      %718 = sbr.rel (0) target = $region97
    $region96: #{cvae_forward.1} parent=1 // pred_region
      %719 = dma.done [#allocation15], 128
    $region97: #{cvae_forward.1} parent=1 // pred_fallthru
      _
    // Predicated region
    $region98: #{cvae_forward.1} parent=1 // pred_check
      _
    $region99: #{cvae_forward.1} parent=1 // pred_check_branch
      %721 = sbr.rel (0) target = $region101
    $region100: #{cvae_forward.1} parent=1 // pred_region
      %722 = dma.done [#allocation15], 128
    $region101: #{cvae_forward.1} parent=1 // pred_fallthru
      _
    %723 = vsyncpa [#allocation3], 1
    %724 = vsyncpa [#allocation6], 1
    %725 = vsyncpa [#allocation9], 1
    %726 = vsyncpa [#allocation12], 1
    %727 = vsyncpa [#allocation4], 1
    %728 = vsyncpa [#allocation15], 1

</llo_original>
